<compile_context>
chip_gen: v5e
topology: v5e:2x2
jax: 0.10.0
libtpu: 0.0.40
codegen_flags: <defaults>
</compile_context>

<pallas_src>
import functools

import jax
import jax.numpy as jnp
from jax.experimental import pallas as pl
from jax.experimental.pallas import tpu as pltpu


def _round_up(v, m):
    return -(-v // m) * m


def _erestimate_kernel(x_ref, p1_ref, p2_ref, p3_ref, p4_ref, o_ref, *, cins):
    """Fused 4-layer 1x1-conv MLP on a (C0, tn) channel-major tile.

    Each p{l}_ref is a packed (Cout_l, Cin_l + 1) slab: [:, :Cin] = folded
    weight, [:, Cin] = folded bias.  Points live on the lane axis, so the
    bias column broadcasts across lanes for free.
    """
    c0, c1, c2, c3 = cins

    def layer(h, p_ref, cin, relu):
        p = p_ref[...]                       # (Cout, Cin+1) whole slab (tiny)
        w = p[:, :cin]                       # (Cout, Cin)
        b = p[:, cin:cin + 1]                # (Cout, 1) -> broadcasts over lanes
        y = jnp.dot(w, h, preferred_element_type=jnp.float32,
                    precision=jax.lax.Precision.HIGHEST) + b
        return jnp.maximum(y, 0.0) if relu else y

    h = x_ref[...]                           # (C0, tn) f32
    h = layer(h, p1_ref, c0, True)
    h = layer(h, p2_ref, c1, True)
    h = layer(h, p3_ref, c2, True)
    o_ref[...] = layer(h, p4_ref, c3, False).astype(o_ref.dtype)


def _fold_bn(w, b, gamma, beta, mean, var, eps=1e-5):
    """Fold inference-mode BatchNorm1d into the preceding 1x1 conv."""
    scale = gamma / jnp.sqrt(var + eps)          # (Cout,)
    w_eff = w * scale[:, None]                   # (Cout, Cin)
    b_eff = (b - mean) * scale + beta            # (Cout,)
    return w_eff, b_eff


def erestimate_forward(x_ncw, params, *, tn=8192, act_vmem_budget=20 << 20):
    """x_ncw: (B, C0, N) float32.  Returns (B, output_dim, N)."""
    B, C0, N = x_ncw.shape

    # Fold BN1/2/3 into conv1/2/3 (conv4 has no BN).
    w1, b1 = _fold_bn(params["w1"], params["b1"], *params["bn1"])
    w2, b2 = _fold_bn(params["w2"], params["b2"], *params["bn2"])
    w3, b3 = _fold_bn(params["w3"], params["b3"], *params["bn3"])
    w4, b4 = params["w4"], params["b4"]
    c1, c2, c3 = w1.shape[0], w2.shape[0], w3.shape[0]
    c_out = w4.shape[0]

    # Pack each layer's weight + bias into one (Cout, Cin+1) slab.
    def slab(w, b):
        return jnp.concatenate([w, b[:, None]], axis=1)
    p1, p2, p3, p4 = slab(w1, b1), slab(w2, b2), slab(w3, b3), slab(w4, b4)

    # ---- VMEM-aware lane-tile (tn) selection -------------------------------
    # Per-lane bytes of streaming/live f32 data:
    #   x double-buffered (2*C0) + h1 + h2 + h3 + output double-buffered
    #   (c_out padded to a full sublane group of 8).
    per_lane_bytes = 4 * (2 * C0 + c1 + c2 + c3 + 2 * _round_up(c_out, 8))
    # Resident parameter slabs, padded to (8,128) VMEM tiles (f32).
    weight_bytes = sum(
        _round_up(co, 8) * _round_up(ci + 1, 128) * 4
        for (co, ci) in ((c1, C0), (c2, c1), (c3, c2), (c_out, c3)))

    VMEM_SOFT_CAP = 48 << 20   # keep comfortably under v7x's 64 MiB physical
    act_budget = max(per_lane_bytes * 128,
                     min(act_vmem_budget, VMEM_SOFT_CAP - weight_bytes))

    n_pad = _round_up(N, 128)
    if N <= 128:
        tn_eff = N                                  # full extent is always legal
    else:
        tn_req = max(128, (tn // 128) * 128)
        budget_tn = max(128, (act_budget // per_lane_bytes) // 128 * 128)
        tn_eff = min(tn_req, 16384, n_pad, budget_tn)
        # Grid-length floor: keep >= 4 blocks total so both v7x TensorCores
        # (and the software pipeline) have work.
        MIN_BLOCKS = 4
        if B < MIN_BLOCKS:
            want_n_tiles = -(-MIN_BLOCKS // B)
            tn_eff = min(tn_eff,
                         max(128, _round_up(pl.cdiv(N, want_n_tiles), 128)))

    grid = (B, pl.cdiv(N, tn_eff))

    # Explicit VMEM limit: covers v5e's 16 MiB scoped default and big tiles
    # on v6e/v7x without relying on defaults.
    est_bytes = weight_bytes + per_lane_bytes * tn_eff + (2 << 20)
    vmem_limit = int(max(est_bytes + est_bytes // 4, 32 << 20))

    x_spec = pl.BlockSpec((pl.Squeezed(), C0, tn_eff), lambda b, j: (b, 0, j))
    out_spec = pl.BlockSpec((pl.Squeezed(), c_out, tn_eff), lambda b, j: (b, 0, j))
    # Whole-array VMEM residency for the small constant parameter slabs.
    vmem_whole = pl.BlockSpec(memory_space=pltpu.MemorySpace.VMEM)

    kernel = functools.partial(_erestimate_kernel, cins=(C0, c1, c2, c3))

    return pl.pallas_call(
        kernel,
        out_shape=jax.ShapeDtypeStruct((B, c_out, N), x_ncw.dtype),
        grid=grid,
        in_specs=[x_spec] + [vmem_whole] * 4,
        out_specs=out_spec,
        compiler_params=pltpu.CompilerParams(
            dimension_semantics=("parallel", "parallel"),
            vmem_limit_bytes=vmem_limit),
    )(x_ncw, p1, p2, p3, p4)


def init_params(key, bottleneck_size=32, output_dim=3):
    """Deterministic synthetic parameters matching EREstimate's shapes."""
    c0 = bottleneck_size
    c1 = bottleneck_size
    c2 = bottleneck_size // 2
    c3 = bottleneck_size // 4
    dims = [(c1, c0), (c2, c1), (c3, c2), (output_dim, c3)]
    keys = jax.random.split(key, 16)
    params = {}
    ki = 0
    for li, (co, ci) in enumerate(dims, start=1):
        params[f"w{li}"] = jax.random.normal(keys[ki], (co, ci), jnp.float32) * 0.05
        ki += 1
        params[f"b{li}"] = jax.random.normal(keys[ki], (co,), jnp.float32) * 0.05
        ki += 1
    # BN params (inference mode): gamma, beta, running_mean, running_var.
    # TODO(synk): training-mode BatchNorm (batch statistics) not modeled; inference mode only.
    for li, co in zip((1, 2, 3), (c1, c2, c3)):
        gamma = 1.0 + 0.1 * jax.random.normal(keys[ki], (co,), jnp.float32); ki += 1
        beta = 0.1 * jax.random.normal(keys[ki], (co,), jnp.float32); ki += 1
        mean = 0.05 * jnp.arange(co, dtype=jnp.float32) / co
        var = 1.0 + 0.01 * jnp.arange(co, dtype=jnp.float32)
        params[f"bn{li}"] = (gamma, beta, mean, var)
    return params


def _reference_forward(x_ncw, params, eps=1e-5):
    """Pure-JAX reference replicating the PyTorch forward (eval-mode BN)."""
    hp = jax.lax.Precision.HIGHEST

    def conv1x1(x, w, b):  # x: (B, Cin, N), w: (Cout, Cin)
        return jnp.einsum("oc,bcn->bon", w, x, precision=hp) + b[None, :, None]

    def bn(x, gamma, beta, mean, var):
        return (x - mean[None, :, None]) / jnp.sqrt(var[None, :, None] + eps) \
               * gamma[None, :, None] + beta[None, :, None]

    h = jax.nn.relu(bn(conv1x1(x_ncw, params["w1"], params["b1"]), *params["bn1"]))
    h = jax.nn.relu(bn(conv1x1(h, params["w2"], params["b2"]), *params["bn2"]))
    h = jax.nn.relu(bn(conv1x1(h, params["w3"], params["b3"]), *params["bn3"]))
    return conv1x1(h, params["w4"], params["b4"])


if __name__ == "__main__":
    key = jax.random.PRNGKey(0)
    k_x1, k_x2, k_x3, k_p = jax.random.split(key, 4)

    C0 = 32                      # bottleneck_size=32, output_dim=3
    params = init_params(k_p, bottleneck_size=C0, output_dim=3)

    # Case 1: N divisible by 128 -> full lane blocks (grid floor gives 4 blocks).
    B1, N1 = 2, 256
    x1 = jax.random.normal(k_x1, (B1, C0, N1), jnp.float32)
    out1 = jax.block_until_ready(erestimate_forward(x1, params))
    ref1 = jax.block_until_ready(_reference_forward(x1, params))
    assert out1.shape == (B1, 3, N1), out1.shape
    assert jnp.allclose(out1, ref1, atol=1e-4, rtol=1e-4), \
        float(jnp.abs(out1 - ref1).max())

    # Case 2: ragged N -> partial last lane block (masked boundary writeback).
    B2, N2 = 2, 200
    x2 = jax.random.normal(k_x2, (B2, C0, N2), jnp.float32)
    out2 = jax.block_until_ready(erestimate_forward(x2, params))
    ref2 = jax.block_until_ready(_reference_forward(x2, params))
    assert out2.shape == (B2, 3, N2), out2.shape
    assert jnp.allclose(out2, ref2, atol=1e-4, rtol=1e-4), \
        float(jnp.abs(out2 - ref2).max())

    # Case 3: B == 1 -> grid-length floor splits N across multiple lane tiles.
    B3, N3 = 1, 384
    x3 = jax.random.normal(k_x3, (B3, C0, N3), jnp.float32)
    out3 = jax.block_until_ready(erestimate_forward(x3, params))
    ref3 = jax.block_until_ready(_reference_forward(x3, params))
    assert out3.shape == (B3, 3, N3), out3.shape
    assert jnp.allclose(out3, ref3, atol=1e-4, rtol=1e-4), \
        float(jnp.abs(out3 - ref3).max())

    print("KERNEL_OK")
</pallas_src>

<mosaic_0001>
module attributes {stable_mosaic.version = 11 : i64} {
  func.func @_erestimate_kernel(%arg0: i32, %arg1: i32, %arg2: memref<1x32x128xf32, #tpu.memory_space<vmem>>, %arg3: memref<32x33xf32, #tpu.memory_space<vmem>>, %arg4: memref<16x33xf32, #tpu.memory_space<vmem>>, %arg5: memref<8x17xf32, #tpu.memory_space<vmem>>, %arg6: memref<3x9xf32, #tpu.memory_space<vmem>>, %arg7: memref<1x3x128xf32, #tpu.memory_space<vmem>>) attributes {dimension_semantics = [#tpu.dimension_semantics<parallel>, #tpu.dimension_semantics<parallel>], iteration_bounds = array<i64: 2, 2>, scalar_prefetch = 0 : i64, scratch_operands = 0 : i64, tpu.core_type = #tpu.core_type<tc>, window_params = [{transform_indices = @transform_0, window_bounds = array<i64: 1, 32, 128>}, {pipeline_mode = #tpu.pipeline_mode<synchronous>, transform_indices = @transform_1, window_bounds = array<i64: 32, 33>}, {pipeline_mode = #tpu.pipeline_mode<synchronous>, transform_indices = @transform_2, window_bounds = array<i64: 16, 33>}, {pipeline_mode = #tpu.pipeline_mode<synchronous>, transform_indices = @transform_3, window_bounds = array<i64: 8, 17>}, {pipeline_mode = #tpu.pipeline_mode<synchronous>, transform_indices = @transform_4, window_bounds = array<i64: 3, 9>}, {transform_indices = @transform_5, window_bounds = array<i64: 1, 3, 128>}]} {
    %c0 = arith.constant 0 : index
    %c0_0 = arith.constant 0 : index
    %c0_1 = arith.constant 0 : index
    %0 = vector.load %arg2[%c0, %c0_0, %c0_1] : memref<1x32x128xf32, #tpu.memory_space<vmem>>, vector<1x32x128xf32>
    %1 = vector.shape_cast %0 : vector<1x32x128xf32> to vector<32x128xf32>
    %c0_2 = arith.constant 0 : index
    %c0_3 = arith.constant 0 : index
    %2 = vector.load %arg3[%c0_2, %c0_3] : memref<32x33xf32, #tpu.memory_space<vmem>>, vector<32x33xf32>
    %3 = vector.extract_strided_slice %2 {offsets = [0, 0], sizes = [32, 32], strides = [1, 1]} : vector<32x33xf32> to vector<32x32xf32>
    %4 = vector.extract_strided_slice %2 {offsets = [0, 32], sizes = [32, 1], strides = [1, 1]} : vector<32x33xf32> to vector<32x1xf32>
    %cst = arith.constant dense<0.000000e+00> : vector<32x128xf32>
    %5 = tpu.matmul %3, %1, %cst {dimension_numbers = #tpu.dot_dimension_numbers<[1], [0], [0], [1], [0, 0, 1, 1], [], []>, precision = #tpu.contract_precision<fp32>} : vector<32x32xf32>, vector<32x128xf32>, vector<32x128xf32> -> vector<32x128xf32>
    %6 = vector.broadcast %4 : vector<32x1xf32> to vector<32x128xf32>
    %7 = arith.addf %5, %6 : vector<32x128xf32>
    %cst_4 = arith.constant 0.000000e+00 : f32
    %8 = vector.broadcast %cst_4 : f32 to vector<32x128xf32>
    %9 = arith.maximumf %7, %8 : vector<32x128xf32>
    %c0_5 = arith.constant 0 : index
    %c0_6 = arith.constant 0 : index
    %10 = vector.load %arg4[%c0_5, %c0_6] : memref<16x33xf32, #tpu.memory_space<vmem>>, vector<16x33xf32>
    %11 = vector.extract_strided_slice %10 {offsets = [0, 0], sizes = [16, 32], strides = [1, 1]} : vector<16x33xf32> to vector<16x32xf32>
    %12 = vector.extract_strided_slice %10 {offsets = [0, 32], sizes = [16, 1], strides = [1, 1]} : vector<16x33xf32> to vector<16x1xf32>
    %cst_7 = arith.constant dense<0.000000e+00> : vector<16x128xf32>
    %13 = tpu.matmul %11, %9, %cst_7 {dimension_numbers = #tpu.dot_dimension_numbers<[1], [0], [0], [1], [0, 0, 1, 1], [], []>, precision = #tpu.contract_precision<fp32>} : vector<16x32xf32>, vector<32x128xf32>, vector<16x128xf32> -> vector<16x128xf32>
    %14 = vector.broadcast %12 : vector<16x1xf32> to vector<16x128xf32>
    %15 = arith.addf %13, %14 : vector<16x128xf32>
    %cst_8 = arith.constant 0.000000e+00 : f32
    %16 = vector.broadcast %cst_8 : f32 to vector<16x128xf32>
    %17 = arith.maximumf %15, %16 : vector<16x128xf32>
    %c0_9 = arith.constant 0 : index
    %c0_10 = arith.constant 0 : index
    %18 = vector.load %arg5[%c0_9, %c0_10] : memref<8x17xf32, #tpu.memory_space<vmem>>, vector<8x17xf32>
    %19 = vector.extract_strided_slice %18 {offsets = [0, 0], sizes = [8, 16], strides = [1, 1]} : vector<8x17xf32> to vector<8x16xf32>
    %20 = vector.extract_strided_slice %18 {offsets = [0, 16], sizes = [8, 1], strides = [1, 1]} : vector<8x17xf32> to vector<8x1xf32>
    %cst_11 = arith.constant dense<0.000000e+00> : vector<8x128xf32>
    %21 = tpu.matmul %19, %17, %cst_11 {dimension_numbers = #tpu.dot_dimension_numbers<[1], [0], [0], [1], [0, 0, 1, 1], [], []>, precision = #tpu.contract_precision<fp32>} : vector<8x16xf32>, vector<16x128xf32>, vector<8x128xf32> -> vector<8x128xf32>
    %22 = vector.broadcast %20 : vector<8x1xf32> to vector<8x128xf32>
    %23 = arith.addf %21, %22 : vector<8x128xf32>
    %cst_12 = arith.constant 0.000000e+00 : f32
    %24 = vector.broadcast %cst_12 : f32 to vector<8x128xf32>
    %25 = arith.maximumf %23, %24 : vector<8x128xf32>
    %c0_13 = arith.constant 0 : index
    %c0_14 = arith.constant 0 : index
    %26 = vector.load %arg6[%c0_13, %c0_14] : memref<3x9xf32, #tpu.memory_space<vmem>>, vector<3x9xf32>
    %27 = vector.extract_strided_slice %26 {offsets = [0, 0], sizes = [3, 8], strides = [1, 1]} : vector<3x9xf32> to vector<3x8xf32>
    %28 = vector.extract_strided_slice %26 {offsets = [0, 8], sizes = [3, 1], strides = [1, 1]} : vector<3x9xf32> to vector<3x1xf32>
    %cst_15 = arith.constant dense<0.000000e+00> : vector<3x128xf32>
    %29 = tpu.matmul %27, %25, %cst_15 {dimension_numbers = #tpu.dot_dimension_numbers<[1], [0], [0], [1], [0, 0, 1, 1], [], []>, precision = #tpu.contract_precision<fp32>} : vector<3x8xf32>, vector<8x128xf32>, vector<3x128xf32> -> vector<3x128xf32>
    %30 = vector.broadcast %28 : vector<3x1xf32> to vector<3x128xf32>
    %31 = arith.addf %29, %30 : vector<3x128xf32>
    %c0_16 = arith.constant 0 : index
    %c0_17 = arith.constant 0 : index
    %c0_18 = arith.constant 0 : index
    %32 = vector.load %arg7[%c0_16, %c0_17, %c0_18] : memref<1x3x128xf32, #tpu.memory_space<vmem>>, vector<1x3x128xf32>
    %33 = vector.shape_cast %32 : vector<1x3x128xf32> to vector<3x128xf32>
    %34 = vector.shape_cast %31 : vector<3x128xf32> to vector<1x3x128xf32>
    tpu.vector_store %arg7[%c0_16, %c0_17, %c0_18], %34 {strides = array<i32>} : memref<1x3x128xf32, #tpu.memory_space<vmem>>, vector<1x3x128xf32>,
    return
  }
  func.func @transform_0(%arg0: i32, %arg1: i32) -> (i32, i32, i32) {
    %c0_i32 = arith.constant 0 : i32
    %c0_i32_0 = arith.constant 0 : i32
    return %arg0, %c0_i32, %arg1 : i32, i32, i32
  }
  func.func @transform_1(%arg0: i32, %arg1: i32) -> (i32, i32) {
    %c0_i32 = arith.constant 0 : i32
    %c0_i32_0 = arith.constant 0 : i32
    %c0_i32_1 = arith.constant 0 : i32
    return %c0_i32, %c0_i32_0 : i32, i32
  }
  func.func @transform_2(%arg0: i32, %arg1: i32) -> (i32, i32) {
    %c0_i32 = arith.constant 0 : i32
    %c0_i32_0 = arith.constant 0 : i32
    %c0_i32_1 = arith.constant 0 : i32
    return %c0_i32, %c0_i32_0 : i32, i32
  }
  func.func @transform_3(%arg0: i32, %arg1: i32) -> (i32, i32) {
    %c0_i32 = arith.constant 0 : i32
    %c0_i32_0 = arith.constant 0 : i32
    %c0_i32_1 = arith.constant 0 : i32
    return %c0_i32, %c0_i32_0 : i32, i32
  }
  func.func @transform_4(%arg0: i32, %arg1: i32) -> (i32, i32) {
    %c0_i32 = arith.constant 0 : i32
    %c0_i32_0 = arith.constant 0 : i32
    %c0_i32_1 = arith.constant 0 : i32
    return %c0_i32, %c0_i32_0 : i32, i32
  }
  func.func @transform_5(%arg0: i32, %arg1: i32) -> (i32, i32, i32) {
    %c0_i32 = arith.constant 0 : i32
    %c0_i32_0 = arith.constant 0 : i32
    return %arg0, %c0_i32, %arg1 : i32, i32, i32
  }
}

</mosaic_0001>

<llo_original>
// kernel: tpu_custom_call.1
$region0: #{tpu_custom_call.1}
  #allocation0 [shape = 'u32[]', space=smem, size = 0x4, offset = 0x4, fixed_abs, tag = 'smem constant byte address 0x4 - core index']
  #allocation1 [shape = 'u32[72,128]{1,0:T(1,128)}', space=vmem, size = 0x9000, scoped, tag = 'internal scratch']
  %s0 = inlined_call_operand.hbm [shape: f32[2,32,256], index: 0, kind: input, shape index: {}]
  %s1 = inlined_call_operand.hbm [shape: f32[32,33], index: 1, kind: input, shape index: {}]
  %s2 = inlined_call_operand.hbm [shape: f32[16,33], index: 2, kind: input, shape index: {}]
  %s3 = inlined_call_operand.hbm [shape: f32[8,17], index: 3, kind: input, shape index: {}]
  %s4 = inlined_call_operand.hbm [shape: f32[3,9], index: 4, kind: input, shape index: {}]
  %s5 = inlined_call_operand.vmem [shape: f32[2,3,256], index: 5, kind: output, shape index: {}]
  %s6 = sld [smem:[#allocation0]]
  $region73: #{tpu_custom_call.1} parent=0
    _
  %s8 = ssub.s32 1, %s6
  %s9 = scalar_select 0, %s8, %s6
  $region1: #{tpu_custom_call.1} parent=0
    #allocation2 [shape = 'u8[32768]{0}', space=vmem, size = 0x8000, scoped, tag = 'input window, operand 0']
    #allocation3 [shape = 's32[2]{0}', space=sflag, size = 0x8, scoped, tag = 'scoped memory for tpu_custom_call.1']
    #allocation4 [shape = 'u8[16384]{0}', space=vmem, size = 0x4000, scoped, tag = 'input window, operand 1, single buffered']
    #allocation5 [shape = 's32[1]{0}', space=sflag, size = 0x4, scoped, tag = 'scoped memory for tpu_custom_call.1']
    #allocation6 [shape = 'u8[8192]{0}', space=vmem, size = 0x2000, scoped, tag = 'input window, operand 2, single buffered']
    #allocation7 [shape = 'u8[4096]{0}', space=vmem, size = 0x1000, scoped, tag = 'input window, operand 3, single buffered']
    #allocation8 [shape = 's32[1]{0}', space=sflag, size = 0x4, scoped, tag = 'scoped memory for tpu_custom_call.1']
    #allocation9 [shape = 'u8[2048]{0}', space=vmem, size = 0x800, scoped, tag = 'input window, operand 4, single buffered']
    %10 = vsyncpa [#allocation3], 0
    %s11 = scalar_lea.sflag [#allocation3], 1
    %12 = vsyncpa %s11, 0
    %13 = vsyncpa [#allocation5], 0
    %14 = vsyncpa [#allocation8], 0
    loop: start=0, step=1, limit=6
    $region2: #{tpu_custom_call.1} parent=1 // loop_pre_header
      _
    $region3: #{tpu_custom_call.1} parent=1 // loop_header
      %s16 = sphi 0, %s20
      %p17 = scmp.ge.s32.totalorder %s16, 6
      %s23 = sphi 0, %s35
      %s24 = sphi 0, %s31
      %s25 = sphi 0, %s23
      %s26 = sphi 0, %s24
      %s27 = sphi 0, %s25
      %s28 = sphi 0, %s26
      %s40 = sphi 0, %s42
      %s43 = sphi 0, %s40
      %s44 = sphi 0, %s43
      %s60 = sphi 0, %s44
      %s64 = sphi 0, %s64
      %s66 = sphi 0, %s64
      %s67 = sphi 0, %s66
      %s81 = sphi 0, %s67
      %s85 = sphi 0, %s85
      %s87 = sphi 0, %s85
      %s88 = sphi 0, %s87
      %s102 = sphi 0, %s88
      %s106 = sphi 0, %s106
      %s108 = sphi 0, %s106
      %s109 = sphi 0, %s108
      %s123 = sphi 0, %s109
      %s127 = sphi 0, %s127
      %s129 = sphi 0, %s127
      %s130 = sphi 0, %s129
      %s144 = sphi 0, %s130
      %s152 = sphi 0, %s154
      %s155 = sphi 0, %s152
      %s156 = sphi 0, %s155
      %s172 = sphi 0, %s156
    $region4: #{tpu_custom_call.1} parent=1 // loop_header_branch
      %19 = sbr.rel (%p17) target = $region8
    $region5: #{tpu_custom_call.1} parent=1 // loop_body
      %s21 = ssub.s32 %s16, 1
      %s22 = ssub.s32 %s16, 2
      %s29 = sadd.s32 1, %s24
      %p30 = scmp.ge.s32.totalorder %s29, 2
      %s31 = scalar_select %p30, 0, %s29
      %s32 = sadd.s32 1, %s23
      %s33 = scalar_select %p30, %s32, %s23
      %p34 = scmp.ge.s32.totalorder %s33, 2
      %s35 = scalar_select %p34, 0, %s33
      %s36 = ssub.s32 %s23, %s35
      %s37 = ssub.s32 %s24, %s31
      %s38 = sor.u32 %s36, %s37
      %p39 = scmp.eq.s32.totalorder %s38, 0
      %s41 = sadd.s32 %s40, 1
      %s42 = scalar_select %p39, %s40, %s41
      %p45 = pneg %p39
      %p46 = scmp.eq.s32.totalorder %s16, 3
      %p47 = por %p45, %p46
      %p48 = scmp.ne.s32.totalorder %s40, %s43
      %p49 = scmp.eq.s32.totalorder %s16, 0
      %p50 = por %p48, %p49
      %p51 = scmp.ne.s32.totalorder %s40, %s43
      %p52 = scmp.eq.s32.totalorder %s21, 3
      %p53 = por %p51, %p52
      %p54 = scmp.ne.s32.totalorder %s43, %s44
      %p55 = scmp.eq.s32.totalorder %s21, 0
      %p56 = por %p54, %p55
      %p57 = scmp.ne.s32.totalorder %s43, %s44
      %p58 = scmp.eq.s32.totalorder %s22, 3
      %p59 = por %p57, %p58
      %p61 = scmp.ne.s32.totalorder %s44, %s60
      %p62 = scmp.eq.s32.totalorder %s22, 0
      %p63 = por %p61, %p62
      %s65 = sadd.s32 %s64, 1
      %p68 = scmp.eq.s32.totalorder %s16, 3
      %p69 = scmp.ne.s32.totalorder %s64, %s66
      %p70 = scmp.eq.s32.totalorder %s16, 0
      %p71 = por %p69, %p70
      %p72 = scmp.ne.s32.totalorder %s64, %s66
      %p73 = scmp.eq.s32.totalorder %s21, 3
      %p74 = por %p72, %p73
      %p75 = scmp.ne.s32.totalorder %s66, %s67
      %p76 = scmp.eq.s32.totalorder %s21, 0
      %p77 = por %p75, %p76
      %p78 = scmp.ne.s32.totalorder %s66, %s67
      %p79 = scmp.eq.s32.totalorder %s22, 3
      %p80 = por %p78, %p79
      %p82 = scmp.ne.s32.totalorder %s67, %s81
      %p83 = scmp.eq.s32.totalorder %s22, 0
      %p84 = por %p82, %p83
      %s86 = sadd.s32 %s85, 1
      %p89 = scmp.eq.s32.totalorder %s16, 3
      %p90 = scmp.ne.s32.totalorder %s85, %s87
      %p91 = scmp.eq.s32.totalorder %s16, 0
      %p92 = por %p90, %p91
      %p93 = scmp.ne.s32.totalorder %s85, %s87
      %p94 = scmp.eq.s32.totalorder %s21, 3
      %p95 = por %p93, %p94
      %p96 = scmp.ne.s32.totalorder %s87, %s88
      %p97 = scmp.eq.s32.totalorder %s21, 0
      %p98 = por %p96, %p97
      %p99 = scmp.ne.s32.totalorder %s87, %s88
      %p100 = scmp.eq.s32.totalorder %s22, 3
      %p101 = por %p99, %p100
      %p103 = scmp.ne.s32.totalorder %s88, %s102
      %p104 = scmp.eq.s32.totalorder %s22, 0
      %p105 = por %p103, %p104
      %s107 = sadd.s32 %s106, 1
      %p110 = scmp.eq.s32.totalorder %s16, 3
      %p111 = scmp.ne.s32.totalorder %s106, %s108
      %p112 = scmp.eq.s32.totalorder %s16, 0
      %p113 = por %p111, %p112
      %p114 = scmp.ne.s32.totalorder %s106, %s108
      %p115 = scmp.eq.s32.totalorder %s21, 3
      %p116 = por %p114, %p115
      %p117 = scmp.ne.s32.totalorder %s108, %s109
      %p118 = scmp.eq.s32.totalorder %s21, 0
      %p119 = por %p117, %p118
      %p120 = scmp.ne.s32.totalorder %s108, %s109
      %p121 = scmp.eq.s32.totalorder %s22, 3
      %p122 = por %p120, %p121
      %p124 = scmp.ne.s32.totalorder %s109, %s123
      %p125 = scmp.eq.s32.totalorder %s22, 0
      %p126 = por %p124, %p125
      %s128 = sadd.s32 %s127, 1
      %p131 = scmp.eq.s32.totalorder %s16, 3
      %p132 = scmp.ne.s32.totalorder %s127, %s129
      %p133 = scmp.eq.s32.totalorder %s16, 0
      %p134 = por %p132, %p133
      %p135 = scmp.ne.s32.totalorder %s127, %s129
      %p136 = scmp.eq.s32.totalorder %s21, 3
      %p137 = por %p135, %p136
      %p138 = scmp.ne.s32.totalorder %s129, %s130
      %p139 = scmp.eq.s32.totalorder %s21, 0
      %p140 = por %p138, %p139
      %p141 = scmp.ne.s32.totalorder %s129, %s130
      %p142 = scmp.eq.s32.totalorder %s22, 3
      %p143 = por %p141, %p142
      %p145 = scmp.ne.s32.totalorder %s130, %s144
      %p146 = scmp.eq.s32.totalorder %s22, 0
      %p147 = por %p145, %p146
      %s148 = ssub.s32 %s23, %s35
      %s149 = ssub.s32 %s24, %s31
      %s150 = sor.u32 %s148, %s149
      %p151 = scmp.eq.s32.totalorder %s150, 0
      %s153 = sadd.s32 %s152, 1
      %s154 = scalar_select %p151, %s152, %s153
      %p157 = pneg %p151
      %p158 = scmp.eq.s32.totalorder %s16, 3
      %p159 = por %p157, %p158
      %p160 = scmp.ne.s32.totalorder %s152, %s155
      %p161 = scmp.eq.s32.totalorder %s16, 0
      %p162 = por %p160, %p161
      %p163 = scmp.ne.s32.totalorder %s152, %s155
      %p164 = scmp.eq.s32.totalorder %s21, 3
      %p165 = por %p163, %p164
      %p166 = scmp.ne.s32.totalorder %s155, %s156
      %p167 = scmp.eq.s32.totalorder %s21, 0
      %p168 = por %p166, %p167
      %p169 = scmp.ne.s32.totalorder %s155, %s156
      %p170 = scmp.eq.s32.totalorder %s22, 3
      %p171 = por %p169, %p170
      %p173 = scmp.ne.s32.totalorder %s156, %s172
      %p174 = scmp.eq.s32.totalorder %s22, 0
      %p175 = por %p173, %p174
      %p176 = scmp.le.s32.totalorder 1, %s16
      %p177 = scmp.lt.s32.totalorder %s16, 5
      %p178 = pnand %p176, %p177
      %p179 = pneg %p178
      // Predicated region
      $region9: #{tpu_custom_call.1} parent=5 // pred_check
        _
      $region10: #{tpu_custom_call.1} parent=5 // pred_check_branch
        %181 = sbr.rel (%p178) target = $region12
      $region11: #{tpu_custom_call.1} parent=5 // pred_region
        %s182 = ssub.s32 %s16, 1
        // Predicated region
        $region13: #{tpu_custom_call.1} parent=11 // pred_check
          %p183 = pneg %p77
        $region14: #{tpu_custom_call.1} parent=11 // pred_check_branch
          %185 = sbr.rel (%p183) target = $region16
        $region15: #{tpu_custom_call.1} parent=11 // pred_region
          %187 = vsyncadd [#allocation5], 0
          %s188 = sshll.u32 %s1, 4
          %s189 = int_to_ptr.hbm [resolvable:$true] %s188
          %s190 = sshll.u32 [#allocation4], 4
          %s191 = int_to_ptr.vmem [resolvable:$true] %s190
          %196 = dma.hbm_to_vmem [thread:$0]  %s189, 512, %s191, [#allocation5], 128, 128, 8
        $region16: #{tpu_custom_call.1} parent=11 // pred_fallthru
          _
        // Predicated region
        $region17: #{tpu_custom_call.1} parent=11 // pred_check
          %p197 = pneg %p98
        $region18: #{tpu_custom_call.1} parent=11 // pred_check_branch
          %199 = sbr.rel (%p197) target = $region20
        $region19: #{tpu_custom_call.1} parent=11 // pred_region
          %201 = vsyncadd [#allocation5], 0
          %s202 = sshll.u32 %s2, 4
          %s203 = int_to_ptr.hbm [resolvable:$true] %s202
          %s204 = sshll.u32 [#allocation6], 4
          %s205 = int_to_ptr.vmem [resolvable:$true] %s204
          %210 = dma.hbm_to_vmem [thread:$0]  %s203, 256, %s205, [#allocation5], 128, 128, 8
        $region20: #{tpu_custom_call.1} parent=11 // pred_fallthru
          _
        // Predicated region
        $region21: #{tpu_custom_call.1} parent=11 // pred_check
          %p211 = pneg %p119
        $region22: #{tpu_custom_call.1} parent=11 // pred_check_branch
          %213 = sbr.rel (%p211) target = $region24
        $region23: #{tpu_custom_call.1} parent=11 // pred_region
          %215 = vsyncadd [#allocation8], 0
          %s217 = sshll.u32 %s3, 4
          %s218 = int_to_ptr.hbm [resolvable:$true] %s217
          %s219 = sshll.u32 [#allocation7], 4
          %s220 = int_to_ptr.vmem [resolvable:$true] %s219
          %222 = dma.hbm_to_vmem [thread:$0]  %s218, 128, %s220, [#allocation8]
        $region24: #{tpu_custom_call.1} parent=11 // pred_fallthru
          _
        // Predicated region
        $region25: #{tpu_custom_call.1} parent=11 // pred_check
          %p223 = pneg %p140
        $region26: #{tpu_custom_call.1} parent=11 // pred_check_branch
          %225 = sbr.rel (%p223) target = $region28
        $region27: #{tpu_custom_call.1} parent=11 // pred_region
          %227 = vsyncadd [#allocation8], 0
          %s229 = sshll.u32 %s4, 4
          %s230 = int_to_ptr.hbm [resolvable:$true] %s229
          %s231 = sshll.u32 [#allocation9], 4
          %s232 = int_to_ptr.vmem [resolvable:$true] %s231
          %234 = dma.hbm_to_vmem [thread:$0]  %s230, 64, %s232, [#allocation8]
        $region28: #{tpu_custom_call.1} parent=11 // pred_fallthru
          _
      $region12: #{tpu_custom_call.1} parent=5 // pred_fallthru
        _
      %p235 = scmp.lt.s32.totalorder %s16, 4
      // Predicated region
      $region29: #{tpu_custom_call.1} parent=5 // pred_check
        %p236 = pneg %p235
      $region30: #{tpu_custom_call.1} parent=5 // pred_check_branch
        %238 = sbr.rel (%p236) target = $region32
      $region31: #{tpu_custom_call.1} parent=5 // pred_region
        // Predicated region
        $region33: #{tpu_custom_call.1} parent=31 // pred_check
          %p239 = pneg %p50
        $region34: #{tpu_custom_call.1} parent=31 // pred_check_branch
          %241 = sbr.rel (%p239) target = $region36
        $region35: #{tpu_custom_call.1} parent=31 // pred_region
          %s242 = sand.u32 %s40, 1
          %s243 = scalar_lea.sflag [#allocation3], %s242
          %s244 = sand.u32 %s40, 1
          %s245 = smul.addr %s244, 32
          %s246 = scalar_lea.vmem [#allocation2], %s245
          %248 = vsyncadd %s243, 0
          %s249 = smul.addr %s23, 8
          %s250 = sadd.s32 %s24, %s249
          %s251 = smul.addr %s250, 8
          %s252 = scalar_lea.hbm %s0, %s251
          %s253 = sshll.u32 %s252, 4
          %s254 = int_to_ptr.hbm [resolvable:$true] %s253
          %s255 = sshll.u32 %s246, 4
          %s256 = int_to_ptr.vmem [resolvable:$true] %s255
          %261 = dma.hbm_to_vmem [thread:$0]  %s254, 512, %s256, %s243, 256, 128, 8
        $region36: #{tpu_custom_call.1} parent=31 // pred_fallthru
          _
      $region32: #{tpu_custom_call.1} parent=5 // pred_fallthru
        _
      %p262 = scmp.le.s32.totalorder 1, %s16
      %p263 = scmp.lt.s32.totalorder %s16, 5
      %p264 = pnand %p262, %p263
      %p265 = pneg %p264
      // Predicated region
      $region37: #{tpu_custom_call.1} parent=5 // pred_check
        _
      $region38: #{tpu_custom_call.1} parent=5 // pred_check_branch
        %267 = sbr.rel (%p264) target = $region40
      $region39: #{tpu_custom_call.1} parent=5 // pred_region
        %s268 = ssub.s32 %s16, 1
        %s269 = sand.u32 %s43, 1
        %s270 = scalar_lea.sflag [#allocation3], %s269
        %s271 = sand.u32 %s43, 1
        %s272 = smul.addr %s271, 32
        %s273 = scalar_lea.vmem [#allocation2], %s272
        // Predicated region
        $region41: #{tpu_custom_call.1} parent=39 // pred_check
          %p274 = pneg %p56
        $region42: #{tpu_custom_call.1} parent=39 // pred_check_branch
          %276 = sbr.rel (%p274) target = $region44
        $region43: #{tpu_custom_call.1} parent=39 // pred_region
          %278 = dma.done %s270, 512
        $region44: #{tpu_custom_call.1} parent=39 // pred_fallthru
          _
        // Predicated region
        $region45: #{tpu_custom_call.1} parent=39 // pred_check
          %p279 = pneg %p77
        $region46: #{tpu_custom_call.1} parent=39 // pred_check_branch
          %281 = sbr.rel (%p279) target = $region48
        $region47: #{tpu_custom_call.1} parent=39 // pred_region
          %283 = dma.done [#allocation5], 512
        $region48: #{tpu_custom_call.1} parent=39 // pred_fallthru
          _
        // Predicated region
        $region49: #{tpu_custom_call.1} parent=39 // pred_check
          %p284 = pneg %p98
        $region50: #{tpu_custom_call.1} parent=39 // pred_check_branch
          %286 = sbr.rel (%p284) target = $region52
        $region51: #{tpu_custom_call.1} parent=39 // pred_region
          %288 = dma.done [#allocation5], 256
        $region52: #{tpu_custom_call.1} parent=39 // pred_fallthru
          _
        // Predicated region
        $region53: #{tpu_custom_call.1} parent=39 // pred_check
          %p289 = pneg %p119
        $region54: #{tpu_custom_call.1} parent=39 // pred_check_branch
          %291 = sbr.rel (%p289) target = $region56
        $region55: #{tpu_custom_call.1} parent=39 // pred_region
          %293 = dma.done [#allocation8], 128
        $region56: #{tpu_custom_call.1} parent=39 // pred_fallthru
          _
        // Predicated region
        $region57: #{tpu_custom_call.1} parent=39 // pred_check
          %p294 = pneg %p140
        $region58: #{tpu_custom_call.1} parent=39 // pred_check_branch
          %296 = sbr.rel (%p294) target = $region60
        $region59: #{tpu_custom_call.1} parent=39 // pred_region
          %298 = dma.done [#allocation8], 64
        $region60: #{tpu_custom_call.1} parent=39 // pred_fallthru
          _
        %s299 = sand.u32 %s43, 1
        %s300 = scalar_lea.sflag [#allocation3], %s299
        %s301 = sand.u32 %s43, 1
        %s302 = smul.addr %s301, 32
        %s303 = scalar_lea.vmem [#allocation2], %s302
        %p304 = pneg %p56
        %p305 = pneg %p53
        %p306 = pneg %p77
        %p307 = pneg %p74
        %p308 = pneg %p98
        %p309 = pneg %p95
        %p310 = pneg %p119
        %p311 = pneg %p116
        %p312 = pneg %p140
        %p313 = pneg %p137
        %p314 = pneg %p168
        %p315 = pneg %p165
        %p316 = scmp.lt.s32.totalorder %s25, 1
        %s317 = scalar_select %p316, %s25, 1
        %p318 = scmp.lt.s32.totalorder %s26, 1
        %s319 = scalar_select %p318, %s26, 1
        %s320 = smul.addr %s317, 2
        %s321 = sadd.s32 %s319, %s320
        %s322 = smul.addr %s321, 4
        %s323 = scalar_lea.vmem %s5, %s322
        %p324 = scmp.lt.s32.totalorder %s25, 1
        %s325 = scalar_select %p324, %s25, 1
        %p326 = scmp.lt.s32.totalorder %s26, 1
        %s327 = scalar_select %p326, %s26, 1
        %s328 = smul.addr %s325, 2
        %s329 = sadd.s32 %s327, %s328
        %s330 = smul.addr %s329, 4
        %s331 = scalar_lea.vmem %s5, %s330
        %v332 = vld [vmem:[%s273] sm:$0xff]
        %v333 = vld [vmem:[%s273 + $0x8] sm:$0xff]
        %v334 = vld [vmem:[%s273 + $0x10] sm:$0xff]
        %v335 = vld [vmem:[%s273 + $0x18] sm:$0xff]
        %v336 = vld [vmem:[#allocation4] sm:$0xff]
        %v337 = vld [vmem:[#allocation4 + $0x8] sm:$0xff]
        %v338 = vld [vmem:[#allocation4 + $0x10] sm:$0xff]
        %v339 = vld [vmem:[#allocation4 + $0x18] sm:$0xff]
        %341 = vset.pattern.permute.xlu0 32
        %342 = vperm.xlu0 %341, %v336
        %v343 = vpop.permute.xlu0 %342
        %346 = vset.pattern.permute.xlu0 32
        %347 = vperm.xlu0 %346, %v337
        %v348 = vpop.permute.xlu0 %347
        %351 = vset.pattern.permute.xlu0 32
        %352 = vperm.xlu0 %351, %v338
        %v353 = vpop.permute.xlu0 %352
        %356 = vset.pattern.permute.xlu0 32
        %357 = vperm.xlu0 %356, %v339
        %v358 = vpop.permute.xlu0 %357
        %vm360 = vcmask 261120
        %v361 = vsel %vm360, %v336, 0
        %v363 = vsel %vm360, %v337, 0
        %v365 = vsel %vm360, %v338, 0
        %v367 = vsel %vm360, %v339, 0
        %369 = vmatpush.msra.mxu0 0.0
        %370 = vmatpush.msra.mxu0 0.0
        %371 = vmatpush.msra.mxu0 0.0
        %372 = vmatpush.msra.mxu0 0.0
        %373 = vmatpush.msra.mxu0 0.0
        %374 = vmatpush.msra.mxu0 0.0
        %375 = vmatpush.msra.mxu0 0.0
        %376 = vmatpush.msra.mxu0 0.0
        %377 = vmatpush.msra.mxu0 0.0
        %378 = vmatpush.msra.mxu0 0.0
        %379 = vmatpush.msra.mxu0 0.0
        %380 = vmatpush.msra.mxu0 0.0
        %v381 = vand.u32 %v335, 4294901760
        %382 = vmatpush.msra.mxu0 %v381
        %v383 = vand.u32 %v334, 4294901760
        %384 = vmatpush.msra.mxu0 %v383
        %v385 = vand.u32 %v333, 4294901760
        %386 = vmatpush.msra.mxu0 %v385
        %v387 = vand.u32 %v332, 4294901760
        %388 = vmatpush.msra.mxu0 %v387
        %v389 = vand.u32 %v361, 4294901760
        %v390 = vsub.f32 %v361, %v389
        %v391 = vand.u32 %v390, 4294901760
        %v392 = vsub.f32 %v390, %v391
        %v393 = vand.u32 %v392, 4294901760
        %394 = vmatmul.f32.gmra.mxu0 %v393
        %v395 = vpop.f32.mrf.mxu0
        %v396 = vadd.f32 %v343, %v395
        %v397 = vand.u32 %v363, 4294901760
        %v398 = vsub.f32 %v363, %v397
        %v399 = vand.u32 %v398, 4294901760
        %v400 = vsub.f32 %v398, %v399
        %v401 = vand.u32 %v400, 4294901760
        %402 = vmatmul.f32.gmra.mxu0 %v401
        %v403 = vpop.f32.mrf.mxu0
        %v404 = vadd.f32 %v348, %v403
        %v405 = vand.u32 %v365, 4294901760
        %v406 = vsub.f32 %v365, %v405
        %v407 = vand.u32 %v406, 4294901760
        %v408 = vsub.f32 %v406, %v407
        %v409 = vand.u32 %v408, 4294901760
        %410 = vmatmul.f32.gmra.mxu0 %v409
        %v411 = vpop.f32.mrf.mxu0
        %v412 = vadd.f32 %v353, %v411
        %v413 = vand.u32 %v367, 4294901760
        %v414 = vsub.f32 %v367, %v413
        %v415 = vand.u32 %v414, 4294901760
        %v416 = vsub.f32 %v414, %v415
        %v417 = vand.u32 %v416, 4294901760
        %418 = vmatmul.f32.gmra.mxu0 %v417
        %v419 = vpop.f32.mrf.mxu0
        %v420 = vadd.f32 %v358, %v419
        %421 = vdwg.mxu0
        %422 = vmatpush.msra.mxu0 0.0
        %423 = vmatpush.msra.mxu0 0.0
        %424 = vmatpush.msra.mxu0 0.0
        %425 = vmatpush.msra.mxu0 0.0
        %426 = vmatpush.msra.mxu0 0.0
        %427 = vmatpush.msra.mxu0 0.0
        %428 = vmatpush.msra.mxu0 0.0
        %429 = vmatpush.msra.mxu0 0.0
        %430 = vmatpush.msra.mxu0 0.0
        %431 = vmatpush.msra.mxu0 0.0
        %432 = vmatpush.msra.mxu0 0.0
        %433 = vmatpush.msra.mxu0 0.0
        %v434 = vand.u32 %v335, 4294901760
        %v435 = vsub.f32 %v335, %v434
        %v436 = vand.u32 %v435, 4294901760
        %v437 = vsub.f32 %v435, %v436
        %v438 = vand.u32 %v437, 4294901760
        %439 = vmatpush.msra.mxu0 %v438
        %v440 = vand.u32 %v334, 4294901760
        %v441 = vsub.f32 %v334, %v440
        %v442 = vand.u32 %v441, 4294901760
        %v443 = vsub.f32 %v441, %v442
        %v444 = vand.u32 %v443, 4294901760
        %445 = vmatpush.msra.mxu0 %v444
        %v446 = vand.u32 %v333, 4294901760
        %v447 = vsub.f32 %v333, %v446
        %v448 = vand.u32 %v447, 4294901760
        %v449 = vsub.f32 %v447, %v448
        %v450 = vand.u32 %v449, 4294901760
        %451 = vmatpush.msra.mxu0 %v450
        %v452 = vand.u32 %v332, 4294901760
        %v453 = vsub.f32 %v332, %v452
        %v454 = vand.u32 %v453, 4294901760
        %v455 = vsub.f32 %v453, %v454
        %v456 = vand.u32 %v455, 4294901760
        %457 = vmatpush.msra.mxu0 %v456
        %v458 = vand.u32 %v361, 4294901760
        %459 = vmatmul.f32.gmra.mxu0 %v458
        %v460 = vpop.f32.mrf.mxu0
        %v461 = vadd.f32 %v396, %v460
        %v462 = vand.u32 %v363, 4294901760
        %463 = vmatmul.f32.gmra.mxu0 %v462
        %v464 = vpop.f32.mrf.mxu0
        %v465 = vadd.f32 %v404, %v464
        %v466 = vand.u32 %v365, 4294901760
        %467 = vmatmul.f32.gmra.mxu0 %v466
        %v468 = vpop.f32.mrf.mxu0
        %v469 = vadd.f32 %v412, %v468
        %v470 = vand.u32 %v367, 4294901760
        %471 = vmatmul.f32.gmra.mxu0 %v470
        %v472 = vpop.f32.mrf.mxu0
        %v473 = vadd.f32 %v420, %v472
        %474 = vdwg.mxu0
        %475 = vmatpush.msra.mxu0 0.0
        %476 = vmatpush.msra.mxu0 0.0
        %477 = vmatpush.msra.mxu0 0.0
        %478 = vmatpush.msra.mxu0 0.0
        %479 = vmatpush.msra.mxu0 0.0
        %480 = vmatpush.msra.mxu0 0.0
        %481 = vmatpush.msra.mxu0 0.0
        %482 = vmatpush.msra.mxu0 0.0
        %483 = vmatpush.msra.mxu0 0.0
        %484 = vmatpush.msra.mxu0 0.0
        %485 = vmatpush.msra.mxu0 0.0
        %486 = vmatpush.msra.mxu0 0.0
        %v487 = vand.u32 %v335, 4294901760
        %v488 = vsub.f32 %v335, %v487
        %489 = vmatpush.msra.mxu0 %v488
        %v490 = vand.u32 %v334, 4294901760
        %v491 = vsub.f32 %v334, %v490
        %492 = vmatpush.msra.mxu0 %v491
        %v493 = vand.u32 %v333, 4294901760
        %v494 = vsub.f32 %v333, %v493
        %495 = vmatpush.msra.mxu0 %v494
        %v496 = vand.u32 %v332, 4294901760
        %v497 = vsub.f32 %v332, %v496
        %498 = vmatpush.msra.mxu0 %v497
        %v499 = vand.u32 %v361, 4294901760
        %v500 = vsub.f32 %v361, %v499
        %501 = vmatmul.f32.gmra.mxu0 %v500
        %v502 = vpop.f32.mrf.mxu0
        %v503 = vadd.f32 %v461, %v502
        %v504 = vand.u32 %v363, 4294901760
        %v505 = vsub.f32 %v363, %v504
        %506 = vmatmul.f32.gmra.mxu0 %v505
        %v507 = vpop.f32.mrf.mxu0
        %v508 = vadd.f32 %v465, %v507
        %v509 = vand.u32 %v365, 4294901760
        %v510 = vsub.f32 %v365, %v509
        %511 = vmatmul.f32.gmra.mxu0 %v510
        %v512 = vpop.f32.mrf.mxu0
        %v513 = vadd.f32 %v469, %v512
        %v514 = vand.u32 %v367, 4294901760
        %v515 = vsub.f32 %v367, %v514
        %516 = vmatmul.f32.gmra.mxu0 %v515
        %v517 = vpop.f32.mrf.mxu0
        %v518 = vadd.f32 %v473, %v517
        %519 = vdwg.mxu0
        %520 = vmatpush.msra.mxu0 0.0
        %521 = vmatpush.msra.mxu0 0.0
        %522 = vmatpush.msra.mxu0 0.0
        %523 = vmatpush.msra.mxu0 0.0
        %524 = vmatpush.msra.mxu0 0.0
        %525 = vmatpush.msra.mxu0 0.0
        %526 = vmatpush.msra.mxu0 0.0
        %527 = vmatpush.msra.mxu0 0.0
        %528 = vmatpush.msra.mxu0 0.0
        %529 = vmatpush.msra.mxu0 0.0
        %530 = vmatpush.msra.mxu0 0.0
        %531 = vmatpush.msra.mxu0 0.0
        %v532 = vand.u32 %v335, 4294901760
        %533 = vmatpush.msra.mxu0 %v532
        %v534 = vand.u32 %v334, 4294901760
        %535 = vmatpush.msra.mxu0 %v534
        %v536 = vand.u32 %v333, 4294901760
        %537 = vmatpush.msra.mxu0 %v536
        %v538 = vand.u32 %v332, 4294901760
        %539 = vmatpush.msra.mxu0 %v538
        %v540 = vand.u32 %v361, 4294901760
        %v541 = vsub.f32 %v361, %v540
        %v542 = vand.u32 %v541, 4294901760
        %543 = vmatmul.f32.gmra.mxu0 %v542
        %v544 = vpop.f32.mrf.mxu0
        %v545 = vadd.f32 %v503, %v544
        %v546 = vand.u32 %v363, 4294901760
        %v547 = vsub.f32 %v363, %v546
        %v548 = vand.u32 %v547, 4294901760
        %549 = vmatmul.f32.gmra.mxu0 %v548
        %v550 = vpop.f32.mrf.mxu0
        %v551 = vadd.f32 %v508, %v550
        %v552 = vand.u32 %v365, 4294901760
        %v553 = vsub.f32 %v365, %v552
        %v554 = vand.u32 %v553, 4294901760
        %555 = vmatmul.f32.gmra.mxu0 %v554
        %v556 = vpop.f32.mrf.mxu0
        %v557 = vadd.f32 %v513, %v556
        %v558 = vand.u32 %v367, 4294901760
        %v559 = vsub.f32 %v367, %v558
        %v560 = vand.u32 %v559, 4294901760
        %561 = vmatmul.f32.gmra.mxu0 %v560
        %v562 = vpop.f32.mrf.mxu0
        %v563 = vadd.f32 %v518, %v562
        %564 = vdwg.mxu0
        %565 = vmatpush.msra.mxu0 0.0
        %566 = vmatpush.msra.mxu0 0.0
        %567 = vmatpush.msra.mxu0 0.0
        %568 = vmatpush.msra.mxu0 0.0
        %569 = vmatpush.msra.mxu0 0.0
        %570 = vmatpush.msra.mxu0 0.0
        %571 = vmatpush.msra.mxu0 0.0
        %572 = vmatpush.msra.mxu0 0.0
        %573 = vmatpush.msra.mxu0 0.0
        %574 = vmatpush.msra.mxu0 0.0
        %575 = vmatpush.msra.mxu0 0.0
        %576 = vmatpush.msra.mxu0 0.0
        %v577 = vand.u32 %v335, 4294901760
        %v578 = vsub.f32 %v335, %v577
        %v579 = vand.u32 %v578, 4294901760
        %580 = vmatpush.msra.mxu0 %v579
        %v581 = vand.u32 %v334, 4294901760
        %v582 = vsub.f32 %v334, %v581
        %v583 = vand.u32 %v582, 4294901760
        %584 = vmatpush.msra.mxu0 %v583
        %v585 = vand.u32 %v333, 4294901760
        %v586 = vsub.f32 %v333, %v585
        %v587 = vand.u32 %v586, 4294901760
        %588 = vmatpush.msra.mxu0 %v587
        %v589 = vand.u32 %v332, 4294901760
        %v590 = vsub.f32 %v332, %v589
        %v591 = vand.u32 %v590, 4294901760
        %592 = vmatpush.msra.mxu0 %v591
        %v593 = vand.u32 %v361, 4294901760
        %594 = vmatmul.f32.gmra.mxu0 %v593
        %v595 = vpop.f32.mrf.mxu0
        %v596 = vadd.f32 %v545, %v595
        %v597 = vand.u32 %v363, 4294901760
        %598 = vmatmul.f32.gmra.mxu0 %v597
        %v599 = vpop.f32.mrf.mxu0
        %v600 = vadd.f32 %v551, %v599
        %v601 = vand.u32 %v365, 4294901760
        %602 = vmatmul.f32.gmra.mxu0 %v601
        %v603 = vpop.f32.mrf.mxu0
        %v604 = vadd.f32 %v557, %v603
        %v605 = vand.u32 %v367, 4294901760
        %606 = vmatmul.f32.gmra.mxu0 %v605
        %v607 = vpop.f32.mrf.mxu0
        %v608 = vadd.f32 %v563, %v607
        %609 = vdwg.mxu0
        %610 = vmatpush.msra.mxu0 0.0
        %611 = vmatpush.msra.mxu0 0.0
        %612 = vmatpush.msra.mxu0 0.0
        %613 = vmatpush.msra.mxu0 0.0
        %614 = vmatpush.msra.mxu0 0.0
        %615 = vmatpush.msra.mxu0 0.0
        %616 = vmatpush.msra.mxu0 0.0
        %617 = vmatpush.msra.mxu0 0.0
        %618 = vmatpush.msra.mxu0 0.0
        %619 = vmatpush.msra.mxu0 0.0
        %620 = vmatpush.msra.mxu0 0.0
        %621 = vmatpush.msra.mxu0 0.0
        %v622 = vand.u32 %v335, 4294901760
        %623 = vmatpush.msra.mxu0 %v622
        %v624 = vand.u32 %v334, 4294901760
        %625 = vmatpush.msra.mxu0 %v624
        %v626 = vand.u32 %v333, 4294901760
        %627 = vmatpush.msra.mxu0 %v626
        %v628 = vand.u32 %v332, 4294901760
        %629 = vmatpush.msra.mxu0 %v628
        %v630 = vand.u32 %v361, 4294901760
        %631 = vmatmul.f32.gmra.mxu0 %v630
        %v632 = vpop.f32.mrf.mxu0
        %v633 = vadd.f32 %v596, %v632
        %v634 = vand.u32 %v363, 4294901760
        %635 = vmatmul.f32.gmra.mxu0 %v634
        %v636 = vpop.f32.mrf.mxu0
        %v637 = vadd.f32 %v600, %v636
        %v638 = vand.u32 %v365, 4294901760
        %639 = vmatmul.f32.gmra.mxu0 %v638
        %v640 = vpop.f32.mrf.mxu0
        %v641 = vadd.f32 %v604, %v640
        %v642 = vand.u32 %v367, 4294901760
        %643 = vmatmul.f32.gmra.mxu0 %v642
        %v644 = vpop.f32.mrf.mxu0
        %v645 = vadd.f32 %v608, %v644
        %646 = vdwg.mxu0
        %v647 = vmax.f32 %v633, 0.0
        %v648 = vmax.f32 %v637, 0.0
        %v649 = vmax.f32 %v641, 0.0
        %v650 = vmax.f32 %v645, 0.0
        %v651 = vld [vmem:[#allocation6] sm:$0xff]
        %v652 = vld [vmem:[#allocation6 + $0x8] sm:$0xff]
        %654 = vset.pattern.permute.xlu0 32
        %655 = vperm.xlu0 %654, %v651
        %v656 = vpop.permute.xlu0 %655
        %659 = vset.pattern.permute.xlu0 32
        %660 = vperm.xlu0 %659, %v652
        %v661 = vpop.permute.xlu0 %660
        %v663 = vsel %vm360, %v651, 0
        %v665 = vsel %vm360, %v652, 0
        %667 = vmatpush.msra.mxu0 0.0
        %668 = vmatpush.msra.mxu0 0.0
        %669 = vmatpush.msra.mxu0 0.0
        %670 = vmatpush.msra.mxu0 0.0
        %671 = vmatpush.msra.mxu0 0.0
        %672 = vmatpush.msra.mxu0 0.0
        %673 = vmatpush.msra.mxu0 0.0
        %674 = vmatpush.msra.mxu0 0.0
        %675 = vmatpush.msra.mxu0 0.0
        %676 = vmatpush.msra.mxu0 0.0
        %677 = vmatpush.msra.mxu0 0.0
        %678 = vmatpush.msra.mxu0 0.0
        %v679 = vand.u32 %v650, 4294901760
        %680 = vmatpush.msra.mxu0 %v679
        %v681 = vand.u32 %v649, 4294901760
        %682 = vmatpush.msra.mxu0 %v681
        %v683 = vand.u32 %v648, 4294901760
        %684 = vmatpush.msra.mxu0 %v683
        %v685 = vand.u32 %v647, 4294901760
        %686 = vmatpush.msra.mxu0 %v685
        %v687 = vand.u32 %v663, 4294901760
        %v688 = vsub.f32 %v663, %v687
        %v689 = vand.u32 %v688, 4294901760
        %v690 = vsub.f32 %v688, %v689
        %v691 = vand.u32 %v690, 4294901760
        %692 = vmatmul.f32.gmra.mxu0 %v691
        %v693 = vpop.f32.mrf.mxu0
        %v694 = vadd.f32 %v656, %v693
        %v695 = vand.u32 %v665, 4294901760
        %v696 = vsub.f32 %v665, %v695
        %v697 = vand.u32 %v696, 4294901760
        %v698 = vsub.f32 %v696, %v697
        %v699 = vand.u32 %v698, 4294901760
        %700 = vmatmul.f32.gmra.mxu0 %v699
        %v701 = vpop.f32.mrf.mxu0
        %v702 = vadd.f32 %v661, %v701
        %703 = vdwg.mxu0
        %704 = vmatpush.msra.mxu0 0.0
        %705 = vmatpush.msra.mxu0 0.0
        %706 = vmatpush.msra.mxu0 0.0
        %707 = vmatpush.msra.mxu0 0.0
        %708 = vmatpush.msra.mxu0 0.0
        %709 = vmatpush.msra.mxu0 0.0
        %710 = vmatpush.msra.mxu0 0.0
        %711 = vmatpush.msra.mxu0 0.0
        %712 = vmatpush.msra.mxu0 0.0
        %713 = vmatpush.msra.mxu0 0.0
        %714 = vmatpush.msra.mxu0 0.0
        %715 = vmatpush.msra.mxu0 0.0
        %v716 = vand.u32 %v650, 4294901760
        %v717 = vsub.f32 %v650, %v716
        %v718 = vand.u32 %v717, 4294901760
        %v719 = vsub.f32 %v717, %v718
        %v720 = vand.u32 %v719, 4294901760
        %721 = vmatpush.msra.mxu0 %v720
        %v722 = vand.u32 %v649, 4294901760
        %v723 = vsub.f32 %v649, %v722
        %v724 = vand.u32 %v723, 4294901760
        %v725 = vsub.f32 %v723, %v724
        %v726 = vand.u32 %v725, 4294901760
        %727 = vmatpush.msra.mxu0 %v726
        %v728 = vand.u32 %v648, 4294901760
        %v729 = vsub.f32 %v648, %v728
        %v730 = vand.u32 %v729, 4294901760
        %v731 = vsub.f32 %v729, %v730
        %v732 = vand.u32 %v731, 4294901760
        %733 = vmatpush.msra.mxu0 %v732
        %v734 = vand.u32 %v647, 4294901760
        %v735 = vsub.f32 %v647, %v734
        %v736 = vand.u32 %v735, 4294901760
        %v737 = vsub.f32 %v735, %v736
        %v738 = vand.u32 %v737, 4294901760
        %739 = vmatpush.msra.mxu0 %v738
        %v740 = vand.u32 %v663, 4294901760
        %741 = vmatmul.f32.gmra.mxu0 %v740
        %v742 = vpop.f32.mrf.mxu0
        %v743 = vadd.f32 %v694, %v742
        %v744 = vand.u32 %v665, 4294901760
        %745 = vmatmul.f32.gmra.mxu0 %v744
        %v746 = vpop.f32.mrf.mxu0
        %v747 = vadd.f32 %v702, %v746
        %748 = vdwg.mxu0
        %749 = vmatpush.msra.mxu0 0.0
        %750 = vmatpush.msra.mxu0 0.0
        %751 = vmatpush.msra.mxu0 0.0
        %752 = vmatpush.msra.mxu0 0.0
        %753 = vmatpush.msra.mxu0 0.0
        %754 = vmatpush.msra.mxu0 0.0
        %755 = vmatpush.msra.mxu0 0.0
        %756 = vmatpush.msra.mxu0 0.0
        %757 = vmatpush.msra.mxu0 0.0
        %758 = vmatpush.msra.mxu0 0.0
        %759 = vmatpush.msra.mxu0 0.0
        %760 = vmatpush.msra.mxu0 0.0
        %v761 = vand.u32 %v650, 4294901760
        %v762 = vsub.f32 %v650, %v761
        %763 = vmatpush.msra.mxu0 %v762
        %v764 = vand.u32 %v649, 4294901760
        %v765 = vsub.f32 %v649, %v764
        %766 = vmatpush.msra.mxu0 %v765
        %v767 = vand.u32 %v648, 4294901760
        %v768 = vsub.f32 %v648, %v767
        %769 = vmatpush.msra.mxu0 %v768
        %v770 = vand.u32 %v647, 4294901760
        %v771 = vsub.f32 %v647, %v770
        %772 = vmatpush.msra.mxu0 %v771
        %v773 = vand.u32 %v663, 4294901760
        %v774 = vsub.f32 %v663, %v773
        %775 = vmatmul.f32.gmra.mxu0 %v774
        %v776 = vpop.f32.mrf.mxu0
        %v777 = vadd.f32 %v743, %v776
        %v778 = vand.u32 %v665, 4294901760
        %v779 = vsub.f32 %v665, %v778
        %780 = vmatmul.f32.gmra.mxu0 %v779
        %v781 = vpop.f32.mrf.mxu0
        %v782 = vadd.f32 %v747, %v781
        %783 = vdwg.mxu0
        %784 = vmatpush.msra.mxu0 0.0
        %785 = vmatpush.msra.mxu0 0.0
        %786 = vmatpush.msra.mxu0 0.0
        %787 = vmatpush.msra.mxu0 0.0
        %788 = vmatpush.msra.mxu0 0.0
        %789 = vmatpush.msra.mxu0 0.0
        %790 = vmatpush.msra.mxu0 0.0
        %791 = vmatpush.msra.mxu0 0.0
        %792 = vmatpush.msra.mxu0 0.0
        %793 = vmatpush.msra.mxu0 0.0
        %794 = vmatpush.msra.mxu0 0.0
        %795 = vmatpush.msra.mxu0 0.0
        %v796 = vand.u32 %v650, 4294901760
        %797 = vmatpush.msra.mxu0 %v796
        %v798 = vand.u32 %v649, 4294901760
        %799 = vmatpush.msra.mxu0 %v798
        %v800 = vand.u32 %v648, 4294901760
        %801 = vmatpush.msra.mxu0 %v800
        %v802 = vand.u32 %v647, 4294901760
        %803 = vmatpush.msra.mxu0 %v802
        %v804 = vand.u32 %v663, 4294901760
        %v805 = vsub.f32 %v663, %v804
        %v806 = vand.u32 %v805, 4294901760
        %807 = vmatmul.f32.gmra.mxu0 %v806
        %v808 = vpop.f32.mrf.mxu0
        %v809 = vadd.f32 %v777, %v808
        %v810 = vand.u32 %v665, 4294901760
        %v811 = vsub.f32 %v665, %v810
        %v812 = vand.u32 %v811, 4294901760
        %813 = vmatmul.f32.gmra.mxu0 %v812
        %v814 = vpop.f32.mrf.mxu0
        %v815 = vadd.f32 %v782, %v814
        %816 = vdwg.mxu0
        %817 = vmatpush.msra.mxu0 0.0
        %818 = vmatpush.msra.mxu0 0.0
        %819 = vmatpush.msra.mxu0 0.0
        %820 = vmatpush.msra.mxu0 0.0
        %821 = vmatpush.msra.mxu0 0.0
        %822 = vmatpush.msra.mxu0 0.0
        %823 = vmatpush.msra.mxu0 0.0
        %824 = vmatpush.msra.mxu0 0.0
        %825 = vmatpush.msra.mxu0 0.0
        %826 = vmatpush.msra.mxu0 0.0
        %827 = vmatpush.msra.mxu0 0.0
        %828 = vmatpush.msra.mxu0 0.0
        %v829 = vand.u32 %v650, 4294901760
        %v830 = vsub.f32 %v650, %v829
        %v831 = vand.u32 %v830, 4294901760
        %832 = vmatpush.msra.mxu0 %v831
        %v833 = vand.u32 %v649, 4294901760
        %v834 = vsub.f32 %v649, %v833
        %v835 = vand.u32 %v834, 4294901760
        %836 = vmatpush.msra.mxu0 %v835
        %v837 = vand.u32 %v648, 4294901760
        %v838 = vsub.f32 %v648, %v837
        %v839 = vand.u32 %v838, 4294901760
        %840 = vmatpush.msra.mxu0 %v839
        %v841 = vand.u32 %v647, 4294901760
        %v842 = vsub.f32 %v647, %v841
        %v843 = vand.u32 %v842, 4294901760
        %844 = vmatpush.msra.mxu0 %v843
        %v845 = vand.u32 %v663, 4294901760
        %846 = vmatmul.f32.gmra.mxu0 %v845
        %v847 = vpop.f32.mrf.mxu0
        %v848 = vadd.f32 %v809, %v847
        %v849 = vand.u32 %v665, 4294901760
        %850 = vmatmul.f32.gmra.mxu0 %v849
        %v851 = vpop.f32.mrf.mxu0
        %v852 = vadd.f32 %v815, %v851
        %853 = vdwg.mxu0
        %854 = vmatpush.msra.mxu0 0.0
        %855 = vmatpush.msra.mxu0 0.0
        %856 = vmatpush.msra.mxu0 0.0
        %857 = vmatpush.msra.mxu0 0.0
        %858 = vmatpush.msra.mxu0 0.0
        %859 = vmatpush.msra.mxu0 0.0
        %860 = vmatpush.msra.mxu0 0.0
        %861 = vmatpush.msra.mxu0 0.0
        %862 = vmatpush.msra.mxu0 0.0
        %863 = vmatpush.msra.mxu0 0.0
        %864 = vmatpush.msra.mxu0 0.0
        %865 = vmatpush.msra.mxu0 0.0
        %v866 = vand.u32 %v650, 4294901760
        %867 = vmatpush.msra.mxu0 %v866
        %v868 = vand.u32 %v649, 4294901760
        %869 = vmatpush.msra.mxu0 %v868
        %v870 = vand.u32 %v648, 4294901760
        %871 = vmatpush.msra.mxu0 %v870
        %v872 = vand.u32 %v647, 4294901760
        %873 = vmatpush.msra.mxu0 %v872
        %v874 = vand.u32 %v663, 4294901760
        %875 = vmatmul.f32.gmra.mxu0 %v874
        %v876 = vpop.f32.mrf.mxu0
        %v877 = vadd.f32 %v848, %v876
        %v878 = vand.u32 %v665, 4294901760
        %879 = vmatmul.f32.gmra.mxu0 %v878
        %v880 = vpop.f32.mrf.mxu0
        %v881 = vadd.f32 %v852, %v880
        %882 = vdwg.mxu0
        %v883 = vmax.f32 %v877, 0.0
        %v884 = vmax.f32 %v881, 0.0
        %v885 = vld [vmem:[#allocation7] sm:$0xff]
        %887 = vset.pattern.permute.xlu0 16
        %888 = vperm.xlu0 %887, %v885
        %v889 = vpop.permute.xlu0 %888
        %vm891 = vcmask 130048
        %v892 = vsel %vm891, %v885, 0
        %894 = vmatpush.msra.mxu0 0.0
        %895 = vmatpush.msra.mxu0 0.0
        %896 = vmatpush.msra.mxu0 0.0
        %897 = vmatpush.msra.mxu0 0.0
        %898 = vmatpush.msra.mxu0 0.0
        %899 = vmatpush.msra.mxu0 0.0
        %900 = vmatpush.msra.mxu0 0.0
        %901 = vmatpush.msra.mxu0 0.0
        %902 = vmatpush.msra.mxu0 0.0
        %903 = vmatpush.msra.mxu0 0.0
        %904 = vmatpush.msra.mxu0 0.0
        %905 = vmatpush.msra.mxu0 0.0
        %906 = vmatpush.msra.mxu0 0.0
        %907 = vmatpush.msra.mxu0 0.0
        %v908 = vand.u32 %v884, 4294901760
        %909 = vmatpush.msra.mxu0 %v908
        %v910 = vand.u32 %v883, 4294901760
        %911 = vmatpush.msra.mxu0 %v910
        %v912 = vand.u32 %v892, 4294901760
        %v913 = vsub.f32 %v892, %v912
        %v914 = vand.u32 %v913, 4294901760
        %v915 = vsub.f32 %v913, %v914
        %v916 = vand.u32 %v915, 4294901760
        %917 = vmatmul.f32.gmra.mxu0 %v916
        %v918 = vpop.f32.mrf.mxu0
        %v919 = vadd.f32 %v889, %v918
        %920 = vdwg.mxu0
        %921 = vmatpush.msra.mxu0 0.0
        %922 = vmatpush.msra.mxu0 0.0
        %923 = vmatpush.msra.mxu0 0.0
        %924 = vmatpush.msra.mxu0 0.0
        %925 = vmatpush.msra.mxu0 0.0
        %926 = vmatpush.msra.mxu0 0.0
        %927 = vmatpush.msra.mxu0 0.0
        %928 = vmatpush.msra.mxu0 0.0
        %929 = vmatpush.msra.mxu0 0.0
        %930 = vmatpush.msra.mxu0 0.0
        %931 = vmatpush.msra.mxu0 0.0
        %932 = vmatpush.msra.mxu0 0.0
        %933 = vmatpush.msra.mxu0 0.0
        %934 = vmatpush.msra.mxu0 0.0
        %v935 = vand.u32 %v884, 4294901760
        %v936 = vsub.f32 %v884, %v935
        %v937 = vand.u32 %v936, 4294901760
        %v938 = vsub.f32 %v936, %v937
        %v939 = vand.u32 %v938, 4294901760
        %940 = vmatpush.msra.mxu0 %v939
        %v941 = vand.u32 %v883, 4294901760
        %v942 = vsub.f32 %v883, %v941
        %v943 = vand.u32 %v942, 4294901760
        %v944 = vsub.f32 %v942, %v943
        %v945 = vand.u32 %v944, 4294901760
        %946 = vmatpush.msra.mxu0 %v945
        %v947 = vand.u32 %v892, 4294901760
        %948 = vmatmul.f32.gmra.mxu0 %v947
        %v949 = vpop.f32.mrf.mxu0
        %v950 = vadd.f32 %v919, %v949
        %951 = vdwg.mxu0
        %952 = vmatpush.msra.mxu0 0.0
        %953 = vmatpush.msra.mxu0 0.0
        %954 = vmatpush.msra.mxu0 0.0
        %955 = vmatpush.msra.mxu0 0.0
        %956 = vmatpush.msra.mxu0 0.0
        %957 = vmatpush.msra.mxu0 0.0
        %958 = vmatpush.msra.mxu0 0.0
        %959 = vmatpush.msra.mxu0 0.0
        %960 = vmatpush.msra.mxu0 0.0
        %961 = vmatpush.msra.mxu0 0.0
        %962 = vmatpush.msra.mxu0 0.0
        %963 = vmatpush.msra.mxu0 0.0
        %964 = vmatpush.msra.mxu0 0.0
        %965 = vmatpush.msra.mxu0 0.0
        %v966 = vand.u32 %v884, 4294901760
        %v967 = vsub.f32 %v884, %v966
        %968 = vmatpush.msra.mxu0 %v967
        %v969 = vand.u32 %v883, 4294901760
        %v970 = vsub.f32 %v883, %v969
        %971 = vmatpush.msra.mxu0 %v970
        %v972 = vand.u32 %v892, 4294901760
        %v973 = vsub.f32 %v892, %v972
        %974 = vmatmul.f32.gmra.mxu0 %v973
        %v975 = vpop.f32.mrf.mxu0
        %v976 = vadd.f32 %v950, %v975
        %977 = vdwg.mxu0
        %978 = vmatpush.msra.mxu0 0.0
        %979 = vmatpush.msra.mxu0 0.0
        %980 = vmatpush.msra.mxu0 0.0
        %981 = vmatpush.msra.mxu0 0.0
        %982 = vmatpush.msra.mxu0 0.0
        %983 = vmatpush.msra.mxu0 0.0
        %984 = vmatpush.msra.mxu0 0.0
        %985 = vmatpush.msra.mxu0 0.0
        %986 = vmatpush.msra.mxu0 0.0
        %987 = vmatpush.msra.mxu0 0.0
        %988 = vmatpush.msra.mxu0 0.0
        %989 = vmatpush.msra.mxu0 0.0
        %990 = vmatpush.msra.mxu0 0.0
        %991 = vmatpush.msra.mxu0 0.0
        %v992 = vand.u32 %v884, 4294901760
        %993 = vmatpush.msra.mxu0 %v992
        %v994 = vand.u32 %v883, 4294901760
        %995 = vmatpush.msra.mxu0 %v994
        %v996 = vand.u32 %v892, 4294901760
        %v997 = vsub.f32 %v892, %v996
        %v998 = vand.u32 %v997, 4294901760
        %999 = vmatmul.f32.gmra.mxu0 %v998
        %v1000 = vpop.f32.mrf.mxu0
        %v1001 = vadd.f32 %v976, %v1000
        %1002 = vdwg.mxu0
        %1003 = vmatpush.msra.mxu0 0.0
        %1004 = vmatpush.msra.mxu0 0.0
        %1005 = vmatpush.msra.mxu0 0.0
        %1006 = vmatpush.msra.mxu0 0.0
        %1007 = vmatpush.msra.mxu0 0.0
        %1008 = vmatpush.msra.mxu0 0.0
        %1009 = vmatpush.msra.mxu0 0.0
        %1010 = vmatpush.msra.mxu0 0.0
        %1011 = vmatpush.msra.mxu0 0.0
        %1012 = vmatpush.msra.mxu0 0.0
        %1013 = vmatpush.msra.mxu0 0.0
        %1014 = vmatpush.msra.mxu0 0.0
        %1015 = vmatpush.msra.mxu0 0.0
        %1016 = vmatpush.msra.mxu0 0.0
        %v1017 = vand.u32 %v884, 4294901760
        %v1018 = vsub.f32 %v884, %v1017
        %v1019 = vand.u32 %v1018, 4294901760
        %1020 = vmatpush.msra.mxu0 %v1019
        %v1021 = vand.u32 %v883, 4294901760
        %v1022 = vsub.f32 %v883, %v1021
        %v1023 = vand.u32 %v1022, 4294901760
        %1024 = vmatpush.msra.mxu0 %v1023
        %v1025 = vand.u32 %v892, 4294901760
        %1026 = vmatmul.f32.gmra.mxu0 %v1025
        %v1027 = vpop.f32.mrf.mxu0
        %v1028 = vadd.f32 %v1001, %v1027
        %1029 = vdwg.mxu0
        %1030 = vmatpush.msra.mxu0 0.0
        %1031 = vmatpush.msra.mxu0 0.0
        %1032 = vmatpush.msra.mxu0 0.0
        %1033 = vmatpush.msra.mxu0 0.0
        %1034 = vmatpush.msra.mxu0 0.0
        %1035 = vmatpush.msra.mxu0 0.0
        %1036 = vmatpush.msra.mxu0 0.0
        %1037 = vmatpush.msra.mxu0 0.0
        %1038 = vmatpush.msra.mxu0 0.0
        %1039 = vmatpush.msra.mxu0 0.0
        %1040 = vmatpush.msra.mxu0 0.0
        %1041 = vmatpush.msra.mxu0 0.0
        %1042 = vmatpush.msra.mxu0 0.0
        %1043 = vmatpush.msra.mxu0 0.0
        %v1044 = vand.u32 %v884, 4294901760
        %1045 = vmatpush.msra.mxu0 %v1044
        %v1046 = vand.u32 %v883, 4294901760
        %1047 = vmatpush.msra.mxu0 %v1046
        %v1048 = vand.u32 %v892, 4294901760
        %1049 = vmatmul.f32.gmra.mxu0 %v1048
        %v1050 = vpop.f32.mrf.mxu0
        %v1051 = vadd.f32 %v1028, %v1050
        %1052 = vdwg.mxu0
        %v1053 = vmax.f32 %v1051, 0.0
        %v1054 = vld [vmem:[#allocation9] sm:$0x7]
        %1056 = vset.pattern.permute.xlu0 8
        %1057 = vperm.xlu0 %1056, %v1054
        %v1058 = vpop.permute.xlu0 %1057
        %vm1060 = vcmask 64512
        %v1061 = vsel %vm1060, %v1054, 0
        %1063 = vmatpush.msra.mxu0 0.0
        %1064 = vmatpush.msra.mxu0 0.0
        %1065 = vmatpush.msra.mxu0 0.0
        %1066 = vmatpush.msra.mxu0 0.0
        %1067 = vmatpush.msra.mxu0 0.0
        %1068 = vmatpush.msra.mxu0 0.0
        %1069 = vmatpush.msra.mxu0 0.0
        %1070 = vmatpush.msra.mxu0 0.0
        %1071 = vmatpush.msra.mxu0 0.0
        %1072 = vmatpush.msra.mxu0 0.0
        %1073 = vmatpush.msra.mxu0 0.0
        %1074 = vmatpush.msra.mxu0 0.0
        %1075 = vmatpush.msra.mxu0 0.0
        %1076 = vmatpush.msra.mxu0 0.0
        %1077 = vmatpush.msra.mxu0 0.0
        %v1078 = vand.u32 %v1053, 4294901760
        %1079 = vmatpush.msra.mxu0 %v1078
        %v1080 = vand.u32 %v1061, 4294901760
        %v1081 = vsub.f32 %v1061, %v1080
        %v1082 = vand.u32 %v1081, 4294901760
        %v1083 = vsub.f32 %v1081, %v1082
        %v1084 = vand.u32 %v1083, 4294901760
        %1085 = vmatmul.f32.gmra.mxu0 %v1084
        %v1086 = vpop.f32.mrf.mxu0
        %v1087 = vadd.f32 %v1058, %v1086
        %1088 = vdwg.mxu0
        %1089 = vmatpush.msra.mxu0 0.0
        %1090 = vmatpush.msra.mxu0 0.0
        %1091 = vmatpush.msra.mxu0 0.0
        %1092 = vmatpush.msra.mxu0 0.0
        %1093 = vmatpush.msra.mxu0 0.0
        %1094 = vmatpush.msra.mxu0 0.0
        %1095 = vmatpush.msra.mxu0 0.0
        %1096 = vmatpush.msra.mxu0 0.0
        %1097 = vmatpush.msra.mxu0 0.0
        %1098 = vmatpush.msra.mxu0 0.0
        %1099 = vmatpush.msra.mxu0 0.0
        %1100 = vmatpush.msra.mxu0 0.0
        %1101 = vmatpush.msra.mxu0 0.0
        %1102 = vmatpush.msra.mxu0 0.0
        %1103 = vmatpush.msra.mxu0 0.0
        %v1104 = vand.u32 %v1053, 4294901760
        %v1105 = vsub.f32 %v1053, %v1104
        %v1106 = vand.u32 %v1105, 4294901760
        %v1107 = vsub.f32 %v1105, %v1106
        %v1108 = vand.u32 %v1107, 4294901760
        %1109 = vmatpush.msra.mxu0 %v1108
        %v1110 = vand.u32 %v1061, 4294901760
        %1111 = vmatmul.f32.gmra.mxu0 %v1110
        %v1112 = vpop.f32.mrf.mxu0
        %v1113 = vadd.f32 %v1087, %v1112
        %1114 = vdwg.mxu0
        %1115 = vmatpush.msra.mxu0 0.0
        %1116 = vmatpush.msra.mxu0 0.0
        %1117 = vmatpush.msra.mxu0 0.0
        %1118 = vmatpush.msra.mxu0 0.0
        %1119 = vmatpush.msra.mxu0 0.0
        %1120 = vmatpush.msra.mxu0 0.0
        %1121 = vmatpush.msra.mxu0 0.0
        %1122 = vmatpush.msra.mxu0 0.0
        %1123 = vmatpush.msra.mxu0 0.0
        %1124 = vmatpush.msra.mxu0 0.0
        %1125 = vmatpush.msra.mxu0 0.0
        %1126 = vmatpush.msra.mxu0 0.0
        %1127 = vmatpush.msra.mxu0 0.0
        %1128 = vmatpush.msra.mxu0 0.0
        %1129 = vmatpush.msra.mxu0 0.0
        %v1130 = vand.u32 %v1053, 4294901760
        %v1131 = vsub.f32 %v1053, %v1130
        %1132 = vmatpush.msra.mxu0 %v1131
        %v1133 = vand.u32 %v1061, 4294901760
        %v1134 = vsub.f32 %v1061, %v1133
        %1135 = vmatmul.f32.gmra.mxu0 %v1134
        %v1136 = vpop.f32.mrf.mxu0
        %v1137 = vadd.f32 %v1113, %v1136
        %1138 = vdwg.mxu0
        %1139 = vmatpush.msra.mxu0 0.0
        %1140 = vmatpush.msra.mxu0 0.0
        %1141 = vmatpush.msra.mxu0 0.0
        %1142 = vmatpush.msra.mxu0 0.0
        %1143 = vmatpush.msra.mxu0 0.0
        %1144 = vmatpush.msra.mxu0 0.0
        %1145 = vmatpush.msra.mxu0 0.0
        %1146 = vmatpush.msra.mxu0 0.0
        %1147 = vmatpush.msra.mxu0 0.0
        %1148 = vmatpush.msra.mxu0 0.0
        %1149 = vmatpush.msra.mxu0 0.0
        %1150 = vmatpush.msra.mxu0 0.0
        %1151 = vmatpush.msra.mxu0 0.0
        %1152 = vmatpush.msra.mxu0 0.0
        %1153 = vmatpush.msra.mxu0 0.0
        %v1154 = vand.u32 %v1053, 4294901760
        %1155 = vmatpush.msra.mxu0 %v1154
        %v1156 = vand.u32 %v1061, 4294901760
        %v1157 = vsub.f32 %v1061, %v1156
        %v1158 = vand.u32 %v1157, 4294901760
        %1159 = vmatmul.f32.gmra.mxu0 %v1158
        %v1160 = vpop.f32.mrf.mxu0
        %v1161 = vadd.f32 %v1137, %v1160
        %1162 = vdwg.mxu0
        %1163 = vmatpush.msra.mxu0 0.0
        %1164 = vmatpush.msra.mxu0 0.0
        %1165 = vmatpush.msra.mxu0 0.0
        %1166 = vmatpush.msra.mxu0 0.0
        %1167 = vmatpush.msra.mxu0 0.0
        %1168 = vmatpush.msra.mxu0 0.0
        %1169 = vmatpush.msra.mxu0 0.0
        %1170 = vmatpush.msra.mxu0 0.0
        %1171 = vmatpush.msra.mxu0 0.0
        %1172 = vmatpush.msra.mxu0 0.0
        %1173 = vmatpush.msra.mxu0 0.0
        %1174 = vmatpush.msra.mxu0 0.0
        %1175 = vmatpush.msra.mxu0 0.0
        %1176 = vmatpush.msra.mxu0 0.0
        %1177 = vmatpush.msra.mxu0 0.0
        %v1178 = vand.u32 %v1053, 4294901760
        %v1179 = vsub.f32 %v1053, %v1178
        %v1180 = vand.u32 %v1179, 4294901760
        %1181 = vmatpush.msra.mxu0 %v1180
        %v1182 = vand.u32 %v1061, 4294901760
        %1183 = vmatmul.f32.gmra.mxu0 %v1182
        %v1184 = vpop.f32.mrf.mxu0
        %v1185 = vadd.f32 %v1161, %v1184
        %1186 = vdwg.mxu0
        %1187 = vmatpush.msra.mxu0 0.0
        %1188 = vmatpush.msra.mxu0 0.0
        %1189 = vmatpush.msra.mxu0 0.0
        %1190 = vmatpush.msra.mxu0 0.0
        %1191 = vmatpush.msra.mxu0 0.0
        %1192 = vmatpush.msra.mxu0 0.0
        %1193 = vmatpush.msra.mxu0 0.0
        %1194 = vmatpush.msra.mxu0 0.0
        %1195 = vmatpush.msra.mxu0 0.0
        %1196 = vmatpush.msra.mxu0 0.0
        %1197 = vmatpush.msra.mxu0 0.0
        %1198 = vmatpush.msra.mxu0 0.0
        %1199 = vmatpush.msra.mxu0 0.0
        %1200 = vmatpush.msra.mxu0 0.0
        %1201 = vmatpush.msra.mxu0 0.0
        %v1202 = vand.u32 %v1053, 4294901760
        %1203 = vmatpush.msra.mxu0 %v1202
        %v1204 = vand.u32 %v1061, 4294901760
        %1205 = vmatmul.f32.gmra.mxu0 %v1204
        %v1206 = vpop.f32.mrf.mxu0
        %v1207 = vadd.f32 %v1185, %v1206
        %1208 = vdwg.mxu0
        %1209 = vst [vmem:[%s331] sm:$0x7] %v1207
        %p1210 = scmp.lt.s32.totalorder %s25, 1
        %s1211 = scalar_select %p1210, %s25, 1
        %p1212 = scmp.lt.s32.totalorder %s26, 1
        %s1213 = scalar_select %p1212, %s26, 1
        %s1214 = smul.addr %s1211, 2
        %s1215 = sadd.s32 %s1213, %s1214
        %s1216 = smul.addr %s1215, 4
        %s1217 = scalar_lea.vmem %s5, %s1216
        // Predicated region
        $region61: #{tpu_custom_call.1} parent=39 // pred_check
          %p1218 = pneg %p165
        $region62: #{tpu_custom_call.1} parent=39 // pred_check_branch
          %1220 = sbr.rel (%p1218) target = $region64
        $region63: #{tpu_custom_call.1} parent=39 // pred_region
          _
        $region64: #{tpu_custom_call.1} parent=39 // pred_fallthru
          _
      $region40: #{tpu_custom_call.1} parent=5 // pred_fallthru
        _
      %p1221 = scmp.le.s32.totalorder 2, %s16
      // Predicated region
      $region65: #{tpu_custom_call.1} parent=5 // pred_check
        %p1222 = pneg %p1221
      $region66: #{tpu_custom_call.1} parent=5 // pred_check_branch
        %1224 = sbr.rel (%p1222) target = $region68
      $region67: #{tpu_custom_call.1} parent=5 // pred_region
        %s1225 = ssub.s32 %s16, 2
        // Predicated region
        $region69: #{tpu_custom_call.1} parent=67 // pred_check
          %p1226 = pneg %p171
        $region70: #{tpu_custom_call.1} parent=67 // pred_check_branch
          %1228 = sbr.rel (%p1226) target = $region72
        $region71: #{tpu_custom_call.1} parent=67 // pred_region
          %p1229 = scmp.lt.s32.totalorder %s27, 1
          %s1230 = scalar_select %p1229, %s27, 1
          %p1231 = scmp.lt.s32.totalorder %s28, 1
          %s1232 = scalar_select %p1231, %s28, 1
          %s1233 = smul.addr %s1230, 2
          %s1234 = sadd.s32 %s1232, %s1233
          %s1235 = smul.addr %s1234, 4
          %s1236 = scalar_lea.vmem %s5, %s1235
        $region72: #{tpu_custom_call.1} parent=67 // pred_fallthru
          _
      $region68: #{tpu_custom_call.1} parent=5 // pred_fallthru
        _
    $region6: #{tpu_custom_call.1} parent=1 // loop_footer
      %s20 = sadd.s32 1, %s16
    $region7: #{tpu_custom_call.1} parent=1 // loop_footer_branch
      %15 = sbr.rel target = $region3
    $region8: #{tpu_custom_call.1} parent=1 // loop_exit
      _
    %1237 = vsyncpa [#allocation3], 1
    %s1238 = scalar_lea.sflag [#allocation3], 1
    %1239 = vsyncpa %s1238, 1
    %1240 = vsyncpa [#allocation5], 1
    %1241 = vsyncpa [#allocation8], 1

</llo_original>
